<compile_context>
chip_gen: v7x
topology: tpu7x:2x2x1
jax: 0.10.0
libtpu: 0.0.40
codegen_flags: <defaults>
</compile_context>

<pallas_src>
import numpy as np
import jax
import jax.numpy as jnp
from jax import lax
from jax.experimental import pallas as pl
from jax.experimental.pallas import tpu as pltpu

# ----- module constants (from nn_lattice_training.py) -----
L = 4
Nx, Ny, Nz = L, L, L
Nin = Nx * Ny * Nz          # 64
Nhid = 2 * L ** 3           # 128
Nout = 2
MU = 1

BLOCK_B_MAX = 1024          # batch rows per grid step (sweepable 512-2048)
OUT_SUB = 8                 # Nout padded to one sublane group for the transposed output
NCAT = Nhid + Nin           # fused weight width: 128 + 64 = 192


# ----- dependent host-side setup (plain numpy; builds the K matrix) -----
def nabla_1d(mu, L):
    nab = np.zeros((L, L))
    for a in range(L):
        for b in range(L):
            if a == b:
                nab[a][b] += 0.5
            if a == (b + 2) % L:
                nab[a][b] -= 0.25
            if a == (b - 2) % L:
                nab[a][b] -= 0.25
    return nab


def k_mat(mu, L):
    nab = nabla_1d(mu, L)
    I1 = np.eye(L)
    a = np.kron(np.kron(nab, I1), I1)
    b = np.kron(np.kron(I1, nab), I1)
    c = np.kron(np.kron(I1, I1), nab)
    nabla_3d = a + b + c
    return mu ** 2 * np.eye(L ** 3) + nabla_3d


def sqrtm_sym(M):
    # K = sqrtm(k(1, 4)); k is symmetric PSD so use eigh (avoids scipy dependency).
    w, V = np.linalg.eigh(M)
    w = np.clip(w, 0.0, None)
    return (V * np.sqrt(w)) @ V.T


def _round_up(n, m):
    return ((n + m - 1) // m) * m


# ----- Pallas kernel: one batch tile of the full forward pass -----
def nqs_kernel(x_ref, wcat_ref, b_ref, w2_ref, o_ref):
    x = x_ref[...]                                                     # (bb, Nin) bf16
    # One fused MXU pass: [x@W1^T | x@K] -> (bb, Nhid + Nin), f32 accumulation.
    xw = jnp.dot(x, wcat_ref[...], preferred_element_type=jnp.float32)
    h = jax.nn.sigmoid(xw[:, :Nhid] + b_ref[...])                      # (bb, Nhid) f32
    kx = xw[:, Nhid:]                                                  # (bb, Nin)  f32
    # Gaussian envelope in f32: -0.5 * sum_i x_i * (Kx)_i (VPU mul + XLU reduce + EUP exp).
    xf = x.astype(jnp.float32)
    env = jnp.exp(-0.5 * jnp.sum(xf * kx, axis=-1, keepdims=True))     # (bb, 1)
    # Fold the per-row envelope into h, then emit a transposed, lane-dense output:
    #   (OUT_SUB, Nhid) . (bb, Nhid)^T -> (OUT_SUB, bb)
    he = (h * env).astype(jnp.bfloat16)
    o = lax.dot_general(w2_ref[...], he,
                        dimension_numbers=(((1,), (1,)), ((), ())),
                        preferred_element_type=jnp.float32)            # (OUT_SUB, bb)
    o_ref[...] = o


# ----- one-time parameter preparation (transpose / fuse / pad / cast) -----
def prepare_params(W1, B, W2, K):
    w1t = jnp.asarray(W1, jnp.float32).T                        # (Nin, Nhid)
    k32 = jnp.asarray(K, jnp.float32)                           # (Nin, Nin)
    # Kernel computes x @ K fused with x @ W1^T; this equals K @ x only for
    # symmetric K, so symmetrize explicitly (sqrtm of a symmetric kernel is symmetric).
    k32 = 0.5 * (k32 + k32.T)
    wcat = jnp.concatenate([w1t, k32], axis=1).astype(jnp.bfloat16)   # (Nin, NCAT)
    b_row = jnp.asarray(B, jnp.float32).reshape(1, Nhid)              # (1, Nhid) f32
    w2p = jnp.zeros((OUT_SUB, Nhid), jnp.float32)
    w2p = w2p.at[:Nout, :].set(jnp.asarray(W2, jnp.float32))          # (OUT_SUB, Nhid)
    return wcat, b_row, w2p.astype(jnp.bfloat16)


# ----- jitted batched forward: pad batch, run grid, un-transpose / un-pad -----
@jax.jit
def _forward_batched(xb, wcat, b_row, w2p):
    nb = xb.shape[0]
    # Block size: big enough to amortize per-step overhead, multiple of 128 so the
    # transposed output tile stays lane-dense (unmasked vst).
    block_b = min(BLOCK_B_MAX, _round_up(nb, 128))
    nb_pad = _round_up(nb, block_b)
    pad = nb_pad - nb
    if pad:
        xb = jnp.pad(xb, ((0, pad), (0, 0)))
    grid = (nb_pad // block_b,)

    out_t = pl.pallas_call(
        nqs_kernel,
        out_shape=jax.ShapeDtypeStruct((OUT_SUB, nb_pad), jnp.float32),
        grid=grid,
        in_specs=[
            # x: pipelined over the batch axis (bf16 -> half the HBM read).
            pl.BlockSpec((block_b, Nin), lambda i: (i, 0)),
            # fused [W1^T | K]: VMEM-resident (constant block index).
            pl.BlockSpec((Nin, NCAT), lambda i: (0, 0)),
            # bias row: VMEM-resident.
            pl.BlockSpec((1, Nhid), lambda i: (0, 0)),
            # W2 padded to 8 sublanes: VMEM-resident.
            pl.BlockSpec((OUT_SUB, Nhid), lambda i: (0, 0)),
        ],
        # Transposed output: batch on the lane axis -> lane-dense, tiny writeback.
        out_specs=pl.BlockSpec((OUT_SUB, block_b), lambda i: (0, i)),
        compiler_params=pltpu.CompilerParams(
            dimension_semantics=("parallel",)),
    )(xb.astype(jnp.bfloat16), wcat, b_row, w2p)

    return out_t[:Nout, :nb].T                                   # (nb, Nout)


def harmonic_nqs_forward(x, params):
    """x: (B, Nin) -> (B, Nout), or (Nin,) -> (Nout,) (single sample)."""
    wcat, b_row, w2p = params
    single = (x.ndim == 1)
    xb = x.reshape(1, Nin) if single else x
    out = _forward_batched(xb, wcat, b_row, w2p)
    return out[0] if single else out


# ----- pure-JAX reference for verification (full-precision matmuls) -----
def ref_forward(x, W1, B, W2, K):
    hp = jax.lax.Precision.HIGHEST
    h = jax.nn.sigmoid(jnp.einsum("bi,hi->bh", x, W1, precision=hp) + B)
    o = jnp.einsum("bh,oh->bo", h, W2, precision=hp)
    kx = jnp.einsum("bi,ij->bj", x, K, precision=hp)
    e = -0.5 * jnp.sum(x * kx, axis=-1, keepdims=True)
    return o * jnp.exp(e)


if __name__ == "__main__":
    # Deterministic parameter init (same distributions as the PyTorch script).
    key = jax.random.PRNGKey(0)
    k_w1, k_b, k_w2, k_x = jax.random.split(key, 4)

    W1 = jax.random.uniform(k_w1, (Nhid, Nin), jnp.float32) * -1.0   # rand * -1
    Bv = jax.random.uniform(k_b, (Nhid,), jnp.float32) * 2.0 - 1.0   # rand * 2 - 1
    W2 = jax.random.uniform(k_w2, (Nout, Nhid), jnp.float32)         # rand
    K = jnp.asarray(sqrtm_sym(k_mat(MU, L)), jnp.float32)            # real sqrtm(k(1,4))

    # Batch of lattice configurations (deliberately not a multiple of the block
    # size to exercise padding). Scaled so the Gaussian envelope stays O(1).
    batch = 200
    x = 0.1 * jax.random.normal(k_x, (batch, Nin), jnp.float32)

    params = prepare_params(W1, Bv, W2, K)

    out = jax.block_until_ready(harmonic_nqs_forward(x, params))
    ref = jax.block_until_ready(ref_forward(x, W1, Bv, W2, K))
    assert out.shape == (batch, Nout)
    # bf16 MXU operands -> ~0.5-1% relative error (dominated by the envelope exponent).
    np.testing.assert_allclose(np.asarray(out), np.asarray(ref), rtol=2e-2, atol=1e-5)

    # Degenerate single-sample path (matches the original 1-D PyTorch call).
    out1 = jax.block_until_ready(harmonic_nqs_forward(x[0], params))
    assert out1.shape == (Nout,)
    np.testing.assert_allclose(np.asarray(out1), np.asarray(ref[0]),
                               rtol=2e-2, atol=1e-5)

    print("KERNEL_OK")
</pallas_src>

<mosaic_0001>
module attributes {stable_mosaic.version = 11 : i64} {
  func.func @nqs_kernel(%arg0: i32, %arg1: memref<256x64xbf16, #tpu.memory_space<vmem>>, %arg2: memref<64x192xbf16, #tpu.memory_space<vmem>>, %arg3: memref<1x128xf32, #tpu.memory_space<vmem>>, %arg4: memref<8x128xbf16, #tpu.memory_space<vmem>>, %arg5: memref<8x256xf32, #tpu.memory_space<vmem>>) attributes {dimension_semantics = [#tpu.dimension_semantics<parallel>], iteration_bounds = array<i64: 1>, scalar_prefetch = 0 : i64, scratch_operands = 0 : i64, tpu.core_type = #tpu.core_type<tc>, window_params = [{transform_indices = @transform_0, window_bounds = array<i64: 256, 64>}, {pipeline_mode = #tpu.pipeline_mode<synchronous>, transform_indices = @transform_1, window_bounds = array<i64: 64, 192>}, {pipeline_mode = #tpu.pipeline_mode<synchronous>, transform_indices = @transform_2, window_bounds = array<i64: 1, 128>}, {pipeline_mode = #tpu.pipeline_mode<synchronous>, transform_indices = @transform_3, window_bounds = array<i64: 8, 128>}, {transform_indices = @transform_4, window_bounds = array<i64: 8, 256>}]} {
    %c0 = arith.constant 0 : index
    %c0_0 = arith.constant 0 : index
    %0 = vector.load %arg1[%c0, %c0_0] : memref<256x64xbf16, #tpu.memory_space<vmem>>, vector<256x64xbf16>
    %c0_1 = arith.constant 0 : index
    %c0_2 = arith.constant 0 : index
    %1 = vector.load %arg2[%c0_1, %c0_2] : memref<64x192xbf16, #tpu.memory_space<vmem>>, vector<64x192xbf16>
    %cst = arith.constant dense<0.000000e+00> : vector<256x192xf32>
    %2 = tpu.matmul %0, %1, %cst {dimension_numbers = #tpu.dot_dimension_numbers<[1], [0], [0], [1], [0, 0, 1, 1], [], []>} : vector<256x64xbf16>, vector<64x192xbf16>, vector<256x192xf32> -> vector<256x192xf32>
    %3 = vector.extract_strided_slice %2 {offsets = [0, 0], sizes = [256, 128], strides = [1, 1]} : vector<256x192xf32> to vector<256x128xf32>
    %c0_3 = arith.constant 0 : index
    %c0_4 = arith.constant 0 : index
    %4 = vector.load %arg3[%c0_3, %c0_4] : memref<1x128xf32, #tpu.memory_space<vmem>>, vector<1x128xf32>
    %5 = vector.broadcast %4 : vector<1x128xf32> to vector<256x128xf32>
    %6 = arith.addf %3, %5 : vector<256x128xf32>
    %7 = arith.negf %6 : vector<256x128xf32>
    %8 = math.exp %7 : vector<256x128xf32>
    %cst_5 = arith.constant 1.000000e+00 : f32
    %9 = vector.broadcast %cst_5 : f32 to vector<256x128xf32>
    %10 = arith.addf %9, %8 : vector<256x128xf32>
    %11 = arith.divf %9, %10 : vector<256x128xf32>
    %12 = vector.extract_strided_slice %2 {offsets = [0, 128], sizes = [256, 64], strides = [1, 1]} : vector<256x192xf32> to vector<256x64xf32>
    %13 = arith.extf %0 : vector<256x64xbf16> to vector<256x64xf32>
    %14 = arith.mulf %13, %12 : vector<256x64xf32>
    %cst_6 = arith.constant dense<0.000000e+00> : vector<256xf32>
    %15 = vector.multi_reduction <add>, %14, %cst_6 [1] : vector<256x64xf32> to vector<256xf32>
    %16 = vector.shape_cast %15 : vector<256xf32> to vector<256x1xf32>
    %cst_7 = arith.constant -5.000000e-01 : f32
    %17 = vector.broadcast %cst_7 : f32 to vector<256x1xf32>
    %18 = arith.mulf %17, %16 : vector<256x1xf32>
    %19 = math.exp %18 : vector<256x1xf32>
    %20 = vector.broadcast %19 : vector<256x1xf32> to vector<256x128xf32>
    %21 = arith.mulf %11, %20 : vector<256x128xf32>
    %22 = arith.truncf %21 : vector<256x128xf32> to vector<256x128xbf16>
    %c0_8 = arith.constant 0 : index
    %c0_9 = arith.constant 0 : index
    %23 = vector.load %arg4[%c0_8, %c0_9] : memref<8x128xbf16, #tpu.memory_space<vmem>>, vector<8x128xbf16>
    %cst_10 = arith.constant dense<0.000000e+00> : vector<8x256xf32>
    %24 = tpu.matmul %23, %22, %cst_10 {dimension_numbers = #tpu.dot_dimension_numbers<[1], [1], [0], [0], [0, 0, 1, 0], [], []>} : vector<8x128xbf16>, vector<256x128xbf16>, vector<8x256xf32> -> vector<8x256xf32>
    %c0_11 = arith.constant 0 : index
    %c0_12 = arith.constant 0 : index
    %25 = vector.load %arg5[%c0_11, %c0_12] : memref<8x256xf32, #tpu.memory_space<vmem>>, vector<8x256xf32>
    tpu.vector_store %arg5[%c0_11, %c0_12], %24 {strides = array<i32>} : memref<8x256xf32, #tpu.memory_space<vmem>>, vector<8x256xf32>,
    return
  }
  func.func @transform_0(%arg0: i32) -> (i32, i32) {
    %c0_i32 = arith.constant 0 : i32
    %c0_i32_0 = arith.constant 0 : i32
    return %arg0, %c0_i32 : i32, i32
  }
  func.func @transform_1(%arg0: i32) -> (i32, i32) {
    %c0_i32 = arith.constant 0 : i32
    %c0_i32_0 = arith.constant 0 : i32
    %c0_i32_1 = arith.constant 0 : i32
    return %c0_i32, %c0_i32_0 : i32, i32
  }
  func.func @transform_2(%arg0: i32) -> (i32, i32) {
    %c0_i32 = arith.constant 0 : i32
    %c0_i32_0 = arith.constant 0 : i32
    %c0_i32_1 = arith.constant 0 : i32
    return %c0_i32, %c0_i32_0 : i32, i32
  }
  func.func @transform_3(%arg0: i32) -> (i32, i32) {
    %c0_i32 = arith.constant 0 : i32
    %c0_i32_0 = arith.constant 0 : i32
    %c0_i32_1 = arith.constant 0 : i32
    return %c0_i32, %c0_i32_0 : i32, i32
  }
  func.func @transform_4(%arg0: i32) -> (i32, i32) {
    %c0_i32 = arith.constant 0 : i32
    %c0_i32_0 = arith.constant 0 : i32
    return %c0_i32, %arg0 : i32, i32
  }
}

</mosaic_0001>

<llo_original>
// kernel: _forward_batched.1
$region0: #{_forward_batched.1}
  #allocation0 [shape = 'u32[]', space=smem, size = 0x4, offset = 0x4, fixed_abs, tag = 'smem constant byte address 0x4 - core index']
  #allocation1 [shape = 'u32[144,128]{1,0:T(1,128)}', space=vmem, size = 0x12000, scoped, tag = 'internal scratch']
  %s0 = inlined_call_operand.vmem [shape: bf16[256,64], index: 0, kind: input, shape index: {}]
  %s1 = inlined_call_operand.vmem [shape: bf16[64,192], index: 1, kind: input, shape index: {}]
  %s2 = inlined_call_operand.vmem [shape: f32[1,128], index: 2, kind: input, shape index: {}]
  %s3 = inlined_call_operand.vmem [shape: bf16[8,128], index: 3, kind: input, shape index: {}]
  %s4 = inlined_call_operand.vmem [shape: f32[8,256], index: 4, kind: output, shape index: {}]
  %s5 = sld [smem:[#allocation0]]
  $region26: #{_forward_batched.1} parent=0
    _
  %s7 = ssub.s32 1, %s5
  %s8 = scalar_select 0, %s7, %s5
  // Predicated region
  $region2: #{_forward_batched.1} parent=0 // pred_check
    _
  $region3: #{_forward_batched.1} parent=0 // pred_check_branch
    %10 = sbr.rel (0) target = $region5
  $region4: #{_forward_batched.1} parent=0 // pred_region
    _
  $region5: #{_forward_batched.1} parent=0 // pred_fallthru
    _
  // Predicated region
  $region6: #{_forward_batched.1} parent=0 // pred_check
    _
  $region7: #{_forward_batched.1} parent=0 // pred_check_branch
    %12 = sbr.rel (0) target = $region9
  $region8: #{_forward_batched.1} parent=0 // pred_region
    _
  $region9: #{_forward_batched.1} parent=0 // pred_fallthru
    _
  // Predicated region
  $region10: #{_forward_batched.1} parent=0 // pred_check
    _
  $region11: #{_forward_batched.1} parent=0 // pred_check_branch
    %14 = sbr.rel (0) target = $region13
  $region12: #{_forward_batched.1} parent=0 // pred_region
    _
  $region13: #{_forward_batched.1} parent=0 // pred_fallthru
    _
  // Predicated region
  $region14: #{_forward_batched.1} parent=0 // pred_check
    _
  $region15: #{_forward_batched.1} parent=0 // pred_check_branch
    %16 = sbr.rel (0) target = $region17
  $region16: #{_forward_batched.1} parent=0 // pred_region
    _
  $region17: #{_forward_batched.1} parent=0 // pred_fallthru
    _
  %v18 = vld [vmem:[%s0] sm:$0xf]
  %v19 = vld [vmem:[%s0 + $0x4] sm:$0xf]
  %v20 = vld [vmem:[%s0 + $0x8] sm:$0xf]
  %v21 = vld [vmem:[%s0 + $0xc] sm:$0xf]
  %v22 = vld [vmem:[%s0 + $0x10] sm:$0xf]
  %v23 = vld [vmem:[%s0 + $0x14] sm:$0xf]
  %v24 = vld [vmem:[%s0 + $0x18] sm:$0xf]
  %v25 = vld [vmem:[%s0 + $0x1c] sm:$0xf]
  %v26 = vld [vmem:[%s0 + $0x20] sm:$0xf]
  %v27 = vld [vmem:[%s0 + $0x24] sm:$0xf]
  %v28 = vld [vmem:[%s0 + $0x28] sm:$0xf]
  %v29 = vld [vmem:[%s0 + $0x2c] sm:$0xf]
  %v30 = vld [vmem:[%s0 + $0x30] sm:$0xf]
  %v31 = vld [vmem:[%s0 + $0x34] sm:$0xf]
  %v32 = vld [vmem:[%s0 + $0x38] sm:$0xf]
  %v33 = vld [vmem:[%s0 + $0x3c] sm:$0xf]
  %v34 = vld [vmem:[%s0 + $0x40] sm:$0xf]
  %v35 = vld [vmem:[%s0 + $0x44] sm:$0xf]
  %v36 = vld [vmem:[%s0 + $0x48] sm:$0xf]
  %v37 = vld [vmem:[%s0 + $0x4c] sm:$0xf]
  %v38 = vld [vmem:[%s0 + $0x50] sm:$0xf]
  %v39 = vld [vmem:[%s0 + $0x54] sm:$0xf]
  %v40 = vld [vmem:[%s0 + $0x58] sm:$0xf]
  %v41 = vld [vmem:[%s0 + $0x5c] sm:$0xf]
  %v42 = vld [vmem:[%s0 + $0x60] sm:$0xf]
  %v43 = vld [vmem:[%s0 + $0x64] sm:$0xf]
  %v44 = vld [vmem:[%s0 + $0x68] sm:$0xf]
  %v45 = vld [vmem:[%s0 + $0x6c] sm:$0xf]
  %v46 = vld [vmem:[%s0 + $0x70] sm:$0xf]
  %v47 = vld [vmem:[%s0 + $0x74] sm:$0xf]
  %v48 = vld [vmem:[%s0 + $0x78] sm:$0xf]
  %v49 = vld [vmem:[%s0 + $0x7c] sm:$0xf]
  %v50 = vld [vmem:[%s1] sm:$0xff]
  %v51 = vld [vmem:[%s1 + $0x8] sm:$0xff]
  %v52 = vld [vmem:[%s1 + $0x10] sm:$0xff]
  %v53 = vld [vmem:[%s1 + $0x18] sm:$0xff]
  %v54 = vld [vmem:[%s1 + $0x20] sm:$0xff]
  %v55 = vld [vmem:[%s1 + $0x28] sm:$0xff]
  %v56 = vld [vmem:[%s1 + $0x30] sm:$0xff]
  %v57 = vld [vmem:[%s1 + $0x38] sm:$0xff]
  %v90 = vunpack.c.l.b16 %v18
  %v91 = vunpack.c.l.b16 %v19
  %v92 = vunpack.c.l.b16 %v20
  %v93 = vunpack.c.l.b16 %v21
  %v94 = vunpack.c.l.b16 %v22
  %v95 = vunpack.c.l.b16 %v23
  %v96 = vunpack.c.l.b16 %v24
  %v97 = vunpack.c.l.b16 %v25
  %v98 = vunpack.c.l.b16 %v26
  %v99 = vunpack.c.l.b16 %v27
  %v100 = vunpack.c.l.b16 %v28
  %v101 = vunpack.c.l.b16 %v29
  %v102 = vunpack.c.l.b16 %v30
  %v103 = vunpack.c.l.b16 %v31
  %v104 = vunpack.c.l.b16 %v32
  %v105 = vunpack.c.l.b16 %v33
  %v106 = vunpack.c.l.b16 %v34
  %v107 = vunpack.c.l.b16 %v35
  %v108 = vunpack.c.l.b16 %v36
  %v109 = vunpack.c.l.b16 %v37
  %v110 = vunpack.c.l.b16 %v38
  %v111 = vunpack.c.l.b16 %v39
  %v112 = vunpack.c.l.b16 %v40
  %v113 = vunpack.c.l.b16 %v41
  %v114 = vunpack.c.l.b16 %v42
  %v115 = vunpack.c.l.b16 %v43
  %v116 = vunpack.c.l.b16 %v44
  %v117 = vunpack.c.l.b16 %v45
  %v118 = vunpack.c.l.b16 %v46
  %v119 = vunpack.c.l.b16 %v47
  %v120 = vunpack.c.l.b16 %v48
  %v121 = vunpack.c.l.b16 %v49
  %v122 = vpack.c.b16 %v91, %v90
  %v123 = vpack.c.b16 %v93, %v92
  %v124 = vpack.c.b16 %v95, %v94
  %v125 = vpack.c.b16 %v97, %v96
  %v126 = vpack.c.b16 %v99, %v98
  %v127 = vpack.c.b16 %v101, %v100
  %v128 = vpack.c.b16 %v103, %v102
  %v129 = vpack.c.b16 %v105, %v104
  %v130 = vpack.c.b16 %v107, %v106
  %v131 = vpack.c.b16 %v109, %v108
  %v132 = vpack.c.b16 %v111, %v110
  %v133 = vpack.c.b16 %v113, %v112
  %v134 = vpack.c.b16 %v115, %v114
  %v135 = vpack.c.b16 %v117, %v116
  %v136 = vpack.c.b16 %v119, %v118
  %v137 = vpack.c.b16 %v121, %v120
  %v146 = vunpack.c.l.b16 %v50
  %v147 = vunpack.c.h.b16 %v50
  %v148 = vunpack.c.l.b16 %v51
  %v149 = vunpack.c.h.b16 %v51
  %v150 = vunpack.c.l.b16 %v52
  %v151 = vunpack.c.h.b16 %v52
  %v152 = vunpack.c.l.b16 %v53
  %v153 = vunpack.c.h.b16 %v53
  %v154 = vunpack.c.l.b16 %v54
  %v155 = vunpack.c.h.b16 %v54
  %v156 = vunpack.c.l.b16 %v55
  %v157 = vunpack.c.h.b16 %v55
  %v158 = vunpack.c.l.b16 %v56
  %v159 = vunpack.c.h.b16 %v56
  %v160 = vunpack.c.l.b16 %v57
  %v161 = vunpack.c.h.b16 %v57
  %v162 = vpack.c.b16 %v148, %v146
  %v163 = vpack.c.b16 %v149, %v147
  %v164 = vpack.c.b16 %v152, %v150
  %v165 = vpack.c.b16 %v153, %v151
  %v166 = vpack.c.b16 %v156, %v154
  %v167 = vpack.c.b16 %v157, %v155
  %v168 = vpack.c.b16 %v160, %v158
  %v169 = vpack.c.b16 %v161, %v159
  %vm178 = vcmask 523264
  %v180 = vsel %vm178, %v122, 0
  %v183 = vsel %vm178, %v123, 0
  %v186 = vsel %vm178, %v124, 0
  %v189 = vsel %vm178, %v125, 0
  %v192 = vsel %vm178, %v126, 0
  %v195 = vsel %vm178, %v127, 0
  %v198 = vsel %vm178, %v128, 0
  %v201 = vsel %vm178, %v129, 0
  %v204 = vsel %vm178, %v130, 0
  %v207 = vsel %vm178, %v131, 0
  %v210 = vsel %vm178, %v132, 0
  %v213 = vsel %vm178, %v133, 0
  %v216 = vsel %vm178, %v134, 0
  %v219 = vsel %vm178, %v135, 0
  %v222 = vsel %vm178, %v136, 0
  %v225 = vsel %vm178, %v137, 0
  %227 = vmatprep.subr.bf16.mxu0 %v163
  %228 = vmatpush1.bf16.msra.mxu0 %v162
  %229 = vmatprep.subr.bf16.mxu0 %v165
  %230 = vmatpush1.bf16.msra.mxu0 %v164
  %231 = vmatprep.subr.bf16.mxu0 %v167
  %232 = vmatpush1.bf16.msra.mxu0 %v166
  %233 = vmatprep.subr.bf16.mxu0 %v169
  %234 = vmatpush1.bf16.msra.mxu0 %v168
  %235 = vmatprep.subr.bf16.mxu0 0
  %236 = vmatpush1.bf16.msra.mxu0 0
  %237 = vmatprep.subr.bf16.mxu0 0
  %238 = vmatpush1.bf16.msra.mxu0 0
  %239 = vmatprep.subr.bf16.mxu0 0
  %240 = vmatpush1.bf16.msra.mxu0 0
  %241 = vmatprep.subr.bf16.mxu0 0
  %242 = vmatpush1.bf16.msra.mxu0 0
  %243 = vmatprep.subr.bf16.mxu0 0
  %244 = vmatpush1.bf16.msra.mxu0 0
  %245 = vmatprep.subr.bf16.mxu0 0
  %246 = vmatpush1.bf16.msra.mxu0 0
  %247 = vmatprep.subr.bf16.mxu0 0
  %248 = vmatpush1.bf16.msra.mxu0 0
  %249 = vmatprep.subr.bf16.mxu0 0
  %250 = vmatpush1.bf16.msra.mxu0 0
  %251 = vmatprep.subr.bf16.mxu0 0
  %252 = vmatpush1.bf16.msra.mxu0 0
  %253 = vmatprep.subr.bf16.mxu0 0
  %254 = vmatpush1.bf16.msra.mxu0 0
  %255 = vmatprep.subr.bf16.mxu0 0
  %256 = vmatpush1.bf16.msra.mxu0 0
  %257 = vmatprep.subr.bf16.mxu0 0
  %258 = vmatpush1.bf16.msra.mxu0 0
  %259 = vmatprep.mubr.bf16.mxu0 0
  %260 = vmatmul.mubr.bf16.gmra.mrb[0].mxu0 %v180
  %v261 = vpop.f32.mrb[0].mxu0
  %v262 = vadd.f32 0.0, %v261
  %v263 = vpop.f32.mrb[0].mxu0
  %v264 = vadd.f32 0.0, %v263
  %v265 = vpop.f32.mrb[0].mxu0
  %v266 = vadd.f32 0.0, %v265
  %v267 = vpop.f32.mrb[0].mxu0
  %v268 = vadd.f32 0.0, %v267
  %269 = vmatprep.mubr.bf16.mxu0 0
  %270 = vmatmul.mubr.bf16.gmra.mrb[0].mxu0 %v183
  %v271 = vpop.f32.mrb[0].mxu0
  %v272 = vadd.f32 0.0, %v271
  %v273 = vpop.f32.mrb[0].mxu0
  %v274 = vadd.f32 0.0, %v273
  %v275 = vpop.f32.mrb[0].mxu0
  %v276 = vadd.f32 0.0, %v275
  %v277 = vpop.f32.mrb[0].mxu0
  %v278 = vadd.f32 0.0, %v277
  %279 = vmatprep.mubr.bf16.mxu0 0
  %280 = vmatmul.mubr.bf16.gmra.mrb[0].mxu0 %v186
  %v281 = vpop.f32.mrb[0].mxu0
  %v282 = vadd.f32 0.0, %v281
  %v283 = vpop.f32.mrb[0].mxu0
  %v284 = vadd.f32 0.0, %v283
  %v285 = vpop.f32.mrb[0].mxu0
  %v286 = vadd.f32 0.0, %v285
  %v287 = vpop.f32.mrb[0].mxu0
  %v288 = vadd.f32 0.0, %v287
  %289 = vmatprep.mubr.bf16.mxu0 0
  %290 = vmatmul.mubr.bf16.gmra.mrb[0].mxu0 %v189
  %v291 = vpop.f32.mrb[0].mxu0
  %v292 = vadd.f32 0.0, %v291
  %v293 = vpop.f32.mrb[0].mxu0
  %v294 = vadd.f32 0.0, %v293
  %v295 = vpop.f32.mrb[0].mxu0
  %v296 = vadd.f32 0.0, %v295
  %v297 = vpop.f32.mrb[0].mxu0
  %v298 = vadd.f32 0.0, %v297
  %299 = vmatprep.mubr.bf16.mxu0 0
  %300 = vmatmul.mubr.bf16.gmra.mrb[0].mxu0 %v192
  %v301 = vpop.f32.mrb[0].mxu0
  %v302 = vadd.f32 0.0, %v301
  %v303 = vpop.f32.mrb[0].mxu0
  %v304 = vadd.f32 0.0, %v303
  %v305 = vpop.f32.mrb[0].mxu0
  %v306 = vadd.f32 0.0, %v305
  %v307 = vpop.f32.mrb[0].mxu0
  %v308 = vadd.f32 0.0, %v307
  %309 = vmatprep.mubr.bf16.mxu0 0
  %310 = vmatmul.mubr.bf16.gmra.mrb[0].mxu0 %v195
  %v311 = vpop.f32.mrb[0].mxu0
  %v312 = vadd.f32 0.0, %v311
  %v313 = vpop.f32.mrb[0].mxu0
  %v314 = vadd.f32 0.0, %v313
  %v315 = vpop.f32.mrb[0].mxu0
  %v316 = vadd.f32 0.0, %v315
  %v317 = vpop.f32.mrb[0].mxu0
  %v318 = vadd.f32 0.0, %v317
  %319 = vmatprep.mubr.bf16.mxu0 0
  %320 = vmatmul.mubr.bf16.gmra.mrb[0].mxu0 %v198
  %v321 = vpop.f32.mrb[0].mxu0
  %v322 = vadd.f32 0.0, %v321
  %v323 = vpop.f32.mrb[0].mxu0
  %v324 = vadd.f32 0.0, %v323
  %v325 = vpop.f32.mrb[0].mxu0
  %v326 = vadd.f32 0.0, %v325
  %v327 = vpop.f32.mrb[0].mxu0
  %v328 = vadd.f32 0.0, %v327
  %329 = vmatprep.mubr.bf16.mxu0 0
  %330 = vmatmul.mubr.bf16.gmra.mrb[0].mxu0 %v201
  %v331 = vpop.f32.mrb[0].mxu0
  %v332 = vadd.f32 0.0, %v331
  %v333 = vpop.f32.mrb[0].mxu0
  %v334 = vadd.f32 0.0, %v333
  %v335 = vpop.f32.mrb[0].mxu0
  %v336 = vadd.f32 0.0, %v335
  %v337 = vpop.f32.mrb[0].mxu0
  %v338 = vadd.f32 0.0, %v337
  %339 = vmatprep.mubr.bf16.mxu0 0
  %340 = vmatmul.mubr.bf16.gmra.mrb[0].mxu0 %v204
  %v341 = vpop.f32.mrb[0].mxu0
  %v342 = vadd.f32 0.0, %v341
  %v343 = vpop.f32.mrb[0].mxu0
  %v344 = vadd.f32 0.0, %v343
  %v345 = vpop.f32.mrb[0].mxu0
  %v346 = vadd.f32 0.0, %v345
  %v347 = vpop.f32.mrb[0].mxu0
  %v348 = vadd.f32 0.0, %v347
  %349 = vmatprep.mubr.bf16.mxu0 0
  %350 = vmatmul.mubr.bf16.gmra.mrb[0].mxu0 %v207
  %v351 = vpop.f32.mrb[0].mxu0
  %v352 = vadd.f32 0.0, %v351
  %v353 = vpop.f32.mrb[0].mxu0
  %v354 = vadd.f32 0.0, %v353
  %v355 = vpop.f32.mrb[0].mxu0
  %v356 = vadd.f32 0.0, %v355
  %v357 = vpop.f32.mrb[0].mxu0
  %v358 = vadd.f32 0.0, %v357
  %359 = vmatprep.mubr.bf16.mxu0 0
  %360 = vmatmul.mubr.bf16.gmra.mrb[0].mxu0 %v210
  %v361 = vpop.f32.mrb[0].mxu0
  %v362 = vadd.f32 0.0, %v361
  %v363 = vpop.f32.mrb[0].mxu0
  %v364 = vadd.f32 0.0, %v363
  %v365 = vpop.f32.mrb[0].mxu0
  %v366 = vadd.f32 0.0, %v365
  %v367 = vpop.f32.mrb[0].mxu0
  %v368 = vadd.f32 0.0, %v367
  %369 = vmatprep.mubr.bf16.mxu0 0
  %370 = vmatmul.mubr.bf16.gmra.mrb[0].mxu0 %v213
  %v371 = vpop.f32.mrb[0].mxu0
  %v372 = vadd.f32 0.0, %v371
  %v373 = vpop.f32.mrb[0].mxu0
  %v374 = vadd.f32 0.0, %v373
  %v375 = vpop.f32.mrb[0].mxu0
  %v376 = vadd.f32 0.0, %v375
  %v377 = vpop.f32.mrb[0].mxu0
  %v378 = vadd.f32 0.0, %v377
  %379 = vmatprep.mubr.bf16.mxu0 0
  %380 = vmatmul.mubr.bf16.gmra.mrb[0].mxu0 %v216
  %v381 = vpop.f32.mrb[0].mxu0
  %v382 = vadd.f32 0.0, %v381
  %v383 = vpop.f32.mrb[0].mxu0
  %v384 = vadd.f32 0.0, %v383
  %v385 = vpop.f32.mrb[0].mxu0
  %v386 = vadd.f32 0.0, %v385
  %v387 = vpop.f32.mrb[0].mxu0
  %v388 = vadd.f32 0.0, %v387
  %389 = vmatprep.mubr.bf16.mxu0 0
  %390 = vmatmul.mubr.bf16.gmra.mrb[0].mxu0 %v219
  %v391 = vpop.f32.mrb[0].mxu0
  %v392 = vadd.f32 0.0, %v391
  %v393 = vpop.f32.mrb[0].mxu0
  %v394 = vadd.f32 0.0, %v393
  %v395 = vpop.f32.mrb[0].mxu0
  %v396 = vadd.f32 0.0, %v395
  %v397 = vpop.f32.mrb[0].mxu0
  %v398 = vadd.f32 0.0, %v397
  %399 = vmatprep.mubr.bf16.mxu0 0
  %400 = vmatmul.mubr.bf16.gmra.mrb[0].mxu0 %v222
  %v401 = vpop.f32.mrb[0].mxu0
  %v402 = vadd.f32 0.0, %v401
  %v403 = vpop.f32.mrb[0].mxu0
  %v404 = vadd.f32 0.0, %v403
  %v405 = vpop.f32.mrb[0].mxu0
  %v406 = vadd.f32 0.0, %v405
  %v407 = vpop.f32.mrb[0].mxu0
  %v408 = vadd.f32 0.0, %v407
  %409 = vmatprep.mubr.bf16.mxu0 0
  %410 = vmatmul.mubr.bf16.gmra.mrb[0].mxu0 %v225
  %v411 = vpop.f32.mrb[0].mxu0
  %v412 = vadd.f32 0.0, %v411
  %v413 = vpop.f32.mrb[0].mxu0
  %v414 = vadd.f32 0.0, %v413
  %v415 = vpop.f32.mrb[0].mxu0
  %v416 = vadd.f32 0.0, %v415
  %v417 = vpop.f32.mrb[0].mxu0
  %v418 = vadd.f32 0.0, %v417
  %419 = vdwg.mxu0
  %v420 = vld [vmem:[%s2] sm:$0x1]
  %v422 = vlaneseq
  %v423 = vshrl.u32 %v422, 7
  %v424 = vsub.s32 0, %v423
  %v425 = vrot.slane %v420, %v424
  %v427 = vadd.f32 %v262, %v425
  %v428 = vadd.f32 %v266, %v425
  %v429 = vadd.f32 %v272, %v425
  %v430 = vadd.f32 %v276, %v425
  %v431 = vadd.f32 %v282, %v425
  %v432 = vadd.f32 %v286, %v425
  %v433 = vadd.f32 %v292, %v425
  %v434 = vadd.f32 %v296, %v425
  %v435 = vadd.f32 %v302, %v425
  %v436 = vadd.f32 %v306, %v425
  %v437 = vadd.f32 %v312, %v425
  %v438 = vadd.f32 %v316, %v425
  %v439 = vadd.f32 %v322, %v425
  %v440 = vadd.f32 %v326, %v425
  %v441 = vadd.f32 %v332, %v425
  %v442 = vadd.f32 %v336, %v425
  %v443 = vadd.f32 %v342, %v425
  %v444 = vadd.f32 %v346, %v425
  %v445 = vadd.f32 %v352, %v425
  %v446 = vadd.f32 %v356, %v425
  %v447 = vadd.f32 %v362, %v425
  %v448 = vadd.f32 %v366, %v425
  %v449 = vadd.f32 %v372, %v425
  %v450 = vadd.f32 %v376, %v425
  %v451 = vadd.f32 %v382, %v425
  %v452 = vadd.f32 %v386, %v425
  %v453 = vadd.f32 %v392, %v425
  %v454 = vadd.f32 %v396, %v425
  %v455 = vadd.f32 %v402, %v425
  %v456 = vadd.f32 %v406, %v425
  %v457 = vadd.f32 %v412, %v425
  %v458 = vadd.f32 %v416, %v425
  %v459 = vxor.u32 %v427, 2147483648
  %v460 = vxor.u32 %v428, 2147483648
  %v461 = vxor.u32 %v429, 2147483648
  %v462 = vxor.u32 %v430, 2147483648
  %v463 = vxor.u32 %v431, 2147483648
  %v464 = vxor.u32 %v432, 2147483648
  %v465 = vxor.u32 %v433, 2147483648
  %v466 = vxor.u32 %v434, 2147483648
  %v467 = vxor.u32 %v435, 2147483648
  %v468 = vxor.u32 %v436, 2147483648
  %v469 = vxor.u32 %v437, 2147483648
  %v470 = vxor.u32 %v438, 2147483648
  %v471 = vxor.u32 %v439, 2147483648
  %v472 = vxor.u32 %v440, 2147483648
  %v473 = vxor.u32 %v441, 2147483648
  %v474 = vxor.u32 %v442, 2147483648
  %v475 = vxor.u32 %v443, 2147483648
  %v476 = vxor.u32 %v444, 2147483648
  %v477 = vxor.u32 %v445, 2147483648
  %v478 = vxor.u32 %v446, 2147483648
  %v479 = vxor.u32 %v447, 2147483648
  %v480 = vxor.u32 %v448, 2147483648
  %v481 = vxor.u32 %v449, 2147483648
  %v482 = vxor.u32 %v450, 2147483648
  %v483 = vxor.u32 %v451, 2147483648
  %v484 = vxor.u32 %v452, 2147483648
  %v485 = vxor.u32 %v453, 2147483648
  %v486 = vxor.u32 %v454, 2147483648
  %v487 = vxor.u32 %v455, 2147483648
  %v488 = vxor.u32 %v456, 2147483648
  %v489 = vxor.u32 %v457, 2147483648
  %v490 = vxor.u32 %v458, 2147483648
  %v491 = vmul.f32 %v459, 1.442695
  %v492 = vpow.pop %v491
  %v493 = vmul.f32 %v460, 1.442695
  %v494 = vpow.pop %v493
  %v495 = vmul.f32 %v461, 1.442695
  %v496 = vpow.pop %v495
  %v497 = vmul.f32 %v462, 1.442695
  %v498 = vpow.pop %v497
  %v499 = vmul.f32 %v463, 1.442695
  %v500 = vpow.pop %v499
  %v501 = vmul.f32 %v464, 1.442695
  %v502 = vpow.pop %v501
  %v503 = vmul.f32 %v465, 1.442695
  %v504 = vpow.pop %v503
  %v505 = vmul.f32 %v466, 1.442695
  %v506 = vpow.pop %v505
  %v507 = vmul.f32 %v467, 1.442695
  %v508 = vpow.pop %v507
  %v509 = vmul.f32 %v468, 1.442695
  %v510 = vpow.pop %v509
  %v511 = vmul.f32 %v469, 1.442695
  %v512 = vpow.pop %v511
  %v513 = vmul.f32 %v470, 1.442695
  %v514 = vpow.pop %v513
  %v515 = vmul.f32 %v471, 1.442695
  %v516 = vpow.pop %v515
  %v517 = vmul.f32 %v472, 1.442695
  %v518 = vpow.pop %v517
  %v519 = vmul.f32 %v473, 1.442695
  %v520 = vpow.pop %v519
  %v521 = vmul.f32 %v474, 1.442695
  %v522 = vpow.pop %v521
  %v523 = vmul.f32 %v475, 1.442695
  %v524 = vpow.pop %v523
  %v525 = vmul.f32 %v476, 1.442695
  %v526 = vpow.pop %v525
  %v527 = vmul.f32 %v477, 1.442695
  %v528 = vpow.pop %v527
  %v529 = vmul.f32 %v478, 1.442695
  %v530 = vpow.pop %v529
  %v531 = vmul.f32 %v479, 1.442695
  %v532 = vpow.pop %v531
  %v533 = vmul.f32 %v480, 1.442695
  %v534 = vpow.pop %v533
  %v535 = vmul.f32 %v481, 1.442695
  %v536 = vpow.pop %v535
  %v537 = vmul.f32 %v482, 1.442695
  %v538 = vpow.pop %v537
  %v539 = vmul.f32 %v483, 1.442695
  %v540 = vpow.pop %v539
  %v541 = vmul.f32 %v484, 1.442695
  %v542 = vpow.pop %v541
  %v543 = vmul.f32 %v485, 1.442695
  %v544 = vpow.pop %v543
  %v545 = vmul.f32 %v486, 1.442695
  %v546 = vpow.pop %v545
  %v547 = vmul.f32 %v487, 1.442695
  %v548 = vpow.pop %v547
  %v549 = vmul.f32 %v488, 1.442695
  %v550 = vpow.pop %v549
  %v551 = vmul.f32 %v489, 1.442695
  %v552 = vpow.pop %v551
  %v553 = vmul.f32 %v490, 1.442695
  %v554 = vpow.pop %v553
  %v555 = vadd.f32 %v492, 1.0
  %v556 = vadd.f32 %v494, 1.0
  %v557 = vadd.f32 %v496, 1.0
  %v558 = vadd.f32 %v498, 1.0
  %v559 = vadd.f32 %v500, 1.0
  %v560 = vadd.f32 %v502, 1.0
  %v561 = vadd.f32 %v504, 1.0
  %v562 = vadd.f32 %v506, 1.0
  %v563 = vadd.f32 %v508, 1.0
  %v564 = vadd.f32 %v510, 1.0
  %v565 = vadd.f32 %v512, 1.0
  %v566 = vadd.f32 %v514, 1.0
  %v567 = vadd.f32 %v516, 1.0
  %v568 = vadd.f32 %v518, 1.0
  %v569 = vadd.f32 %v520, 1.0
  %v570 = vadd.f32 %v522, 1.0
  %v571 = vadd.f32 %v524, 1.0
  %v572 = vadd.f32 %v526, 1.0
  %v573 = vadd.f32 %v528, 1.0
  %v574 = vadd.f32 %v530, 1.0
  %v575 = vadd.f32 %v532, 1.0
  %v576 = vadd.f32 %v534, 1.0
  %v577 = vadd.f32 %v536, 1.0
  %v578 = vadd.f32 %v538, 1.0
  %v579 = vadd.f32 %v540, 1.0
  %v580 = vadd.f32 %v542, 1.0
  %v581 = vadd.f32 %v544, 1.0
  %v582 = vadd.f32 %v546, 1.0
  %v583 = vadd.f32 %v548, 1.0
  %v584 = vadd.f32 %v550, 1.0
  %v585 = vadd.f32 %v552, 1.0
  %v586 = vadd.f32 %v554, 1.0
  %v587 = vrcp.pop %v555
  %v588 = vmul.f32 1.0, %v587
  %v589 = vrcp.pop %v556
  %v590 = vmul.f32 1.0, %v589
  %v591 = vrcp.pop %v557
  %v592 = vmul.f32 1.0, %v591
  %v593 = vrcp.pop %v558
  %v594 = vmul.f32 1.0, %v593
  %v595 = vrcp.pop %v559
  %v596 = vmul.f32 1.0, %v595
  %v597 = vrcp.pop %v560
  %v598 = vmul.f32 1.0, %v597
  %v599 = vrcp.pop %v561
  %v600 = vmul.f32 1.0, %v599
  %v601 = vrcp.pop %v562
  %v602 = vmul.f32 1.0, %v601
  %v603 = vrcp.pop %v563
  %v604 = vmul.f32 1.0, %v603
  %v605 = vrcp.pop %v564
  %v606 = vmul.f32 1.0, %v605
  %v607 = vrcp.pop %v565
  %v608 = vmul.f32 1.0, %v607
  %v609 = vrcp.pop %v566
  %v610 = vmul.f32 1.0, %v609
  %v611 = vrcp.pop %v567
  %v612 = vmul.f32 1.0, %v611
  %v613 = vrcp.pop %v568
  %v614 = vmul.f32 1.0, %v613
  %v615 = vrcp.pop %v569
  %v616 = vmul.f32 1.0, %v615
  %v617 = vrcp.pop %v570
  %v618 = vmul.f32 1.0, %v617
  %v619 = vrcp.pop %v571
  %v620 = vmul.f32 1.0, %v619
  %v621 = vrcp.pop %v572
  %v622 = vmul.f32 1.0, %v621
  %v623 = vrcp.pop %v573
  %v624 = vmul.f32 1.0, %v623
  %v625 = vrcp.pop %v574
  %v626 = vmul.f32 1.0, %v625
  %v627 = vrcp.pop %v575
  %v628 = vmul.f32 1.0, %v627
  %v629 = vrcp.pop %v576
  %v630 = vmul.f32 1.0, %v629
  %v631 = vrcp.pop %v577
  %v632 = vmul.f32 1.0, %v631
  %v633 = vrcp.pop %v578
  %v634 = vmul.f32 1.0, %v633
  %v635 = vrcp.pop %v579
  %v636 = vmul.f32 1.0, %v635
  %v637 = vrcp.pop %v580
  %v638 = vmul.f32 1.0, %v637
  %v639 = vrcp.pop %v581
  %v640 = vmul.f32 1.0, %v639
  %v641 = vrcp.pop %v582
  %v642 = vmul.f32 1.0, %v641
  %v643 = vrcp.pop %v583
  %v644 = vmul.f32 1.0, %v643
  %v645 = vrcp.pop %v584
  %v646 = vmul.f32 1.0, %v645
  %v647 = vrcp.pop %v585
  %v648 = vmul.f32 1.0, %v647
  %v649 = vrcp.pop %v586
  %v650 = vmul.f32 1.0, %v649
  %v651 = vunpack.c.l.bf16 %v18
  %v652 = vunpack.c.l.bf16 %v19
  %v653 = vunpack.c.l.bf16 %v20
  %v654 = vunpack.c.l.bf16 %v21
  %v655 = vunpack.c.l.bf16 %v22
  %v656 = vunpack.c.l.bf16 %v23
  %v657 = vunpack.c.l.bf16 %v24
  %v658 = vunpack.c.l.bf16 %v25
  %v659 = vunpack.c.l.bf16 %v26
  %v660 = vunpack.c.l.bf16 %v27
  %v661 = vunpack.c.l.bf16 %v28
  %v662 = vunpack.c.l.bf16 %v29
  %v663 = vunpack.c.l.bf16 %v30
  %v664 = vunpack.c.l.bf16 %v31
  %v665 = vunpack.c.l.bf16 %v32
  %v666 = vunpack.c.l.bf16 %v33
  %v667 = vunpack.c.l.bf16 %v34
  %v668 = vunpack.c.l.bf16 %v35
  %v669 = vunpack.c.l.bf16 %v36
  %v670 = vunpack.c.l.bf16 %v37
  %v671 = vunpack.c.l.bf16 %v38
  %v672 = vunpack.c.l.bf16 %v39
  %v673 = vunpack.c.l.bf16 %v40
  %v674 = vunpack.c.l.bf16 %v41
  %v675 = vunpack.c.l.bf16 %v42
  %v676 = vunpack.c.l.bf16 %v43
  %v677 = vunpack.c.l.bf16 %v44
  %v678 = vunpack.c.l.bf16 %v45
  %v679 = vunpack.c.l.bf16 %v46
  %v680 = vunpack.c.l.bf16 %v47
  %v681 = vunpack.c.l.bf16 %v48
  %v682 = vunpack.c.l.bf16 %v49
  %v683 = vmul.f32 %v651, %v264
  %v684 = vmul.f32 %v652, %v268
  %v685 = vmul.f32 %v653, %v274
  %v686 = vmul.f32 %v654, %v278
  %v687 = vmul.f32 %v655, %v284
  %v688 = vmul.f32 %v656, %v288
  %v689 = vmul.f32 %v657, %v294
  %v690 = vmul.f32 %v658, %v298
  %v691 = vmul.f32 %v659, %v304
  %v692 = vmul.f32 %v660, %v308
  %v693 = vmul.f32 %v661, %v314
  %v694 = vmul.f32 %v662, %v318
  %v695 = vmul.f32 %v663, %v324
  %v696 = vmul.f32 %v664, %v328
  %v697 = vmul.f32 %v665, %v334
  %v698 = vmul.f32 %v666, %v338
  %v699 = vmul.f32 %v667, %v344
  %v700 = vmul.f32 %v668, %v348
  %v701 = vmul.f32 %v669, %v354
  %v702 = vmul.f32 %v670, %v358
  %v703 = vmul.f32 %v671, %v364
  %v704 = vmul.f32 %v672, %v368
  %v705 = vmul.f32 %v673, %v374
  %v706 = vmul.f32 %v674, %v378
  %v707 = vmul.f32 %v675, %v384
  %v708 = vmul.f32 %v676, %v388
  %v709 = vmul.f32 %v677, %v394
  %v710 = vmul.f32 %v678, %v398
  %v711 = vmul.f32 %v679, %v404
  %v712 = vmul.f32 %v680, %v408
  %v713 = vmul.f32 %v681, %v414
  %v714 = vmul.f32 %v682, %v418
  %v715 = vsel %vm178, %v683, 0.0
  %716 = vadd.xlane.f32.xlu0 %v715
  %v717 = vpop.xlane.xlu0 %716
  %v718 = vsel %vm178, %v684, 0.0
  %719 = vadd.xlane.f32.xlu0 %v718
  %v720 = vpop.xlane.xlu0 %719
  %v721 = vsel %vm178, %v685, 0.0
  %722 = vadd.xlane.f32.xlu0 %v721
  %v723 = vpop.xlane.xlu0 %722
  %v724 = vsel %vm178, %v686, 0.0
  %725 = vadd.xlane.f32.xlu0 %v724
  %v726 = vpop.xlane.xlu0 %725
  %v727 = vsel %vm178, %v687, 0.0
  %728 = vadd.xlane.f32.xlu0 %v727
  %v729 = vpop.xlane.xlu0 %728
  %v730 = vsel %vm178, %v688, 0.0
  %731 = vadd.xlane.f32.xlu0 %v730
  %v732 = vpop.xlane.xlu0 %731
  %v733 = vsel %vm178, %v689, 0.0
  %734 = vadd.xlane.f32.xlu0 %v733
  %v735 = vpop.xlane.xlu0 %734
  %v736 = vsel %vm178, %v690, 0.0
  %737 = vadd.xlane.f32.xlu0 %v736
  %v738 = vpop.xlane.xlu0 %737
  %v739 = vsel %vm178, %v691, 0.0
  %740 = vadd.xlane.f32.xlu0 %v739
  %v741 = vpop.xlane.xlu0 %740
  %v742 = vsel %vm178, %v692, 0.0
  %743 = vadd.xlane.f32.xlu0 %v742
  %v744 = vpop.xlane.xlu0 %743
  %v745 = vsel %vm178, %v693, 0.0
  %746 = vadd.xlane.f32.xlu0 %v745
  %v747 = vpop.xlane.xlu0 %746
  %v748 = vsel %vm178, %v694, 0.0
  %749 = vadd.xlane.f32.xlu0 %v748
  %v750 = vpop.xlane.xlu0 %749
  %v751 = vsel %vm178, %v695, 0.0
  %752 = vadd.xlane.f32.xlu0 %v751
  %v753 = vpop.xlane.xlu0 %752
  %v754 = vsel %vm178, %v696, 0.0
  %755 = vadd.xlane.f32.xlu0 %v754
  %v756 = vpop.xlane.xlu0 %755
  %v757 = vsel %vm178, %v697, 0.0
  %758 = vadd.xlane.f32.xlu0 %v757
  %v759 = vpop.xlane.xlu0 %758
  %v760 = vsel %vm178, %v698, 0.0
  %761 = vadd.xlane.f32.xlu0 %v760
  %v762 = vpop.xlane.xlu0 %761
  %v763 = vsel %vm178, %v699, 0.0
  %764 = vadd.xlane.f32.xlu0 %v763
  %v765 = vpop.xlane.xlu0 %764
  %v766 = vsel %vm178, %v700, 0.0
  %767 = vadd.xlane.f32.xlu0 %v766
  %v768 = vpop.xlane.xlu0 %767
  %v769 = vsel %vm178, %v701, 0.0
  %770 = vadd.xlane.f32.xlu0 %v769
  %v771 = vpop.xlane.xlu0 %770
  %v772 = vsel %vm178, %v702, 0.0
  %773 = vadd.xlane.f32.xlu0 %v772
  %v774 = vpop.xlane.xlu0 %773
  %v775 = vsel %vm178, %v703, 0.0
  %776 = vadd.xlane.f32.xlu0 %v775
  %v777 = vpop.xlane.xlu0 %776
  %v778 = vsel %vm178, %v704, 0.0
  %779 = vadd.xlane.f32.xlu0 %v778
  %v780 = vpop.xlane.xlu0 %779
  %v781 = vsel %vm178, %v705, 0.0
  %782 = vadd.xlane.f32.xlu0 %v781
  %v783 = vpop.xlane.xlu0 %782
  %v784 = vsel %vm178, %v706, 0.0
  %785 = vadd.xlane.f32.xlu0 %v784
  %v786 = vpop.xlane.xlu0 %785
  %v787 = vsel %vm178, %v707, 0.0
  %788 = vadd.xlane.f32.xlu0 %v787
  %v789 = vpop.xlane.xlu0 %788
  %v790 = vsel %vm178, %v708, 0.0
  %791 = vadd.xlane.f32.xlu0 %v790
  %v792 = vpop.xlane.xlu0 %791
  %v793 = vsel %vm178, %v709, 0.0
  %794 = vadd.xlane.f32.xlu0 %v793
  %v795 = vpop.xlane.xlu0 %794
  %v796 = vsel %vm178, %v710, 0.0
  %797 = vadd.xlane.f32.xlu0 %v796
  %v798 = vpop.xlane.xlu0 %797
  %v799 = vsel %vm178, %v711, 0.0
  %800 = vadd.xlane.f32.xlu0 %v799
  %v801 = vpop.xlane.xlu0 %800
  %v802 = vsel %vm178, %v712, 0.0
  %803 = vadd.xlane.f32.xlu0 %v802
  %v804 = vpop.xlane.xlu0 %803
  %v805 = vsel %vm178, %v713, 0.0
  %806 = vadd.xlane.f32.xlu0 %v805
  %v807 = vpop.xlane.xlu0 %806
  %v808 = vsel %vm178, %v714, 0.0
  %809 = vadd.xlane.f32.xlu0 %v808
  %v810 = vpop.xlane.xlu0 %809
  %v811 = vmul.f32 %v717, -0.5
  %v812 = vmul.f32 %v720, -0.5
  %v813 = vmul.f32 %v723, -0.5
  %v814 = vmul.f32 %v726, -0.5
  %v815 = vmul.f32 %v729, -0.5
  %v816 = vmul.f32 %v732, -0.5
  %v817 = vmul.f32 %v735, -0.5
  %v818 = vmul.f32 %v738, -0.5
  %v819 = vmul.f32 %v741, -0.5
  %v820 = vmul.f32 %v744, -0.5
  %v821 = vmul.f32 %v747, -0.5
  %v822 = vmul.f32 %v750, -0.5
  %v823 = vmul.f32 %v753, -0.5
  %v824 = vmul.f32 %v756, -0.5
  %v825 = vmul.f32 %v759, -0.5
  %v826 = vmul.f32 %v762, -0.5
  %v827 = vmul.f32 %v765, -0.5
  %v828 = vmul.f32 %v768, -0.5
  %v829 = vmul.f32 %v771, -0.5
  %v830 = vmul.f32 %v774, -0.5
  %v831 = vmul.f32 %v777, -0.5
  %v832 = vmul.f32 %v780, -0.5
  %v833 = vmul.f32 %v783, -0.5
  %v834 = vmul.f32 %v786, -0.5
  %v835 = vmul.f32 %v789, -0.5
  %v836 = vmul.f32 %v792, -0.5
  %v837 = vmul.f32 %v795, -0.5
  %v838 = vmul.f32 %v798, -0.5
  %v839 = vmul.f32 %v801, -0.5
  %v840 = vmul.f32 %v804, -0.5
  %v841 = vmul.f32 %v807, -0.5
  %v842 = vmul.f32 %v810, -0.5
  %v843 = vmul.f32 %v811, 1.442695
  %v844 = vpow.pop %v843
  %v845 = vmul.f32 %v812, 1.442695
  %v846 = vpow.pop %v845
  %v847 = vmul.f32 %v813, 1.442695
  %v848 = vpow.pop %v847
  %v849 = vmul.f32 %v814, 1.442695
  %v850 = vpow.pop %v849
  %v851 = vmul.f32 %v815, 1.442695
  %v852 = vpow.pop %v851
  %v853 = vmul.f32 %v816, 1.442695
  %v854 = vpow.pop %v853
  %v855 = vmul.f32 %v817, 1.442695
  %v856 = vpow.pop %v855
  %v857 = vmul.f32 %v818, 1.442695
  %v858 = vpow.pop %v857
  %v859 = vmul.f32 %v819, 1.442695
  %v860 = vpow.pop %v859
  %v861 = vmul.f32 %v820, 1.442695
  %v862 = vpow.pop %v861
  %v863 = vmul.f32 %v821, 1.442695
  %v864 = vpow.pop %v863
  %v865 = vmul.f32 %v822, 1.442695
  %v866 = vpow.pop %v865
  %v867 = vmul.f32 %v823, 1.442695
  %v868 = vpow.pop %v867
  %v869 = vmul.f32 %v824, 1.442695
  %v870 = vpow.pop %v869
  %v871 = vmul.f32 %v825, 1.442695
  %v872 = vpow.pop %v871
  %v873 = vmul.f32 %v826, 1.442695
  %v874 = vpow.pop %v873
  %v875 = vmul.f32 %v827, 1.442695
  %v876 = vpow.pop %v875
  %v877 = vmul.f32 %v828, 1.442695
  %v878 = vpow.pop %v877
  %v879 = vmul.f32 %v829, 1.442695
  %v880 = vpow.pop %v879
  %v881 = vmul.f32 %v830, 1.442695
  %v882 = vpow.pop %v881
  %v883 = vmul.f32 %v831, 1.442695
  %v884 = vpow.pop %v883
  %v885 = vmul.f32 %v832, 1.442695
  %v886 = vpow.pop %v885
  %v887 = vmul.f32 %v833, 1.442695
  %v888 = vpow.pop %v887
  %v889 = vmul.f32 %v834, 1.442695
  %v890 = vpow.pop %v889
  %v891 = vmul.f32 %v835, 1.442695
  %v892 = vpow.pop %v891
  %v893 = vmul.f32 %v836, 1.442695
  %v894 = vpow.pop %v893
  %v895 = vmul.f32 %v837, 1.442695
  %v896 = vpow.pop %v895
  %v897 = vmul.f32 %v838, 1.442695
  %v898 = vpow.pop %v897
  %v899 = vmul.f32 %v839, 1.442695
  %v900 = vpow.pop %v899
  %v901 = vmul.f32 %v840, 1.442695
  %v902 = vpow.pop %v901
  %v903 = vmul.f32 %v841, 1.442695
  %v904 = vpow.pop %v903
  %v905 = vmul.f32 %v842, 1.442695
  %v906 = vpow.pop %v905
  %v907 = vmul.f32 %v588, %v844
  %v908 = vmul.f32 %v590, %v846
  %v909 = vmul.f32 %v592, %v848
  %v910 = vmul.f32 %v594, %v850
  %v911 = vmul.f32 %v596, %v852
  %v912 = vmul.f32 %v598, %v854
  %v913 = vmul.f32 %v600, %v856
  %v914 = vmul.f32 %v602, %v858
  %v915 = vmul.f32 %v604, %v860
  %v916 = vmul.f32 %v606, %v862
  %v917 = vmul.f32 %v608, %v864
  %v918 = vmul.f32 %v610, %v866
  %v919 = vmul.f32 %v612, %v868
  %v920 = vmul.f32 %v614, %v870
  %v921 = vmul.f32 %v616, %v872
  %v922 = vmul.f32 %v618, %v874
  %v923 = vmul.f32 %v620, %v876
  %v924 = vmul.f32 %v622, %v878
  %v925 = vmul.f32 %v624, %v880
  %v926 = vmul.f32 %v626, %v882
  %v927 = vmul.f32 %v628, %v884
  %v928 = vmul.f32 %v630, %v886
  %v929 = vmul.f32 %v632, %v888
  %v930 = vmul.f32 %v634, %v890
  %v931 = vmul.f32 %v636, %v892
  %v932 = vmul.f32 %v638, %v894
  %v933 = vmul.f32 %v640, %v896
  %v934 = vmul.f32 %v642, %v898
  %v935 = vmul.f32 %v644, %v900
  %v936 = vmul.f32 %v646, %v902
  %v937 = vmul.f32 %v648, %v904
  %v938 = vmul.f32 %v650, %v906
  %v939 = vpack.c.bf16 %v908, %v907
  %v940 = vpack.c.bf16 %v910, %v909
  %v941 = vpack.c.bf16 %v912, %v911
  %v942 = vpack.c.bf16 %v914, %v913
  %v943 = vpack.c.bf16 %v916, %v915
  %v944 = vpack.c.bf16 %v918, %v917
  %v945 = vpack.c.bf16 %v920, %v919
  %v946 = vpack.c.bf16 %v922, %v921
  %v947 = vpack.c.bf16 %v924, %v923
  %v948 = vpack.c.bf16 %v926, %v925
  %v949 = vpack.c.bf16 %v928, %v927
  %v950 = vpack.c.bf16 %v930, %v929
  %v951 = vpack.c.bf16 %v932, %v931
  %v952 = vpack.c.bf16 %v934, %v933
  %v953 = vpack.c.bf16 %v936, %v935
  %v954 = vpack.c.bf16 %v938, %v937
  %v955 = vld [vmem:[%s3] sm:$0xf]
  %956 = vmatprep.subr.bf16.mxu0 0
  %957 = vmatpush1.bf16.xpose.msra.mxu0 %v939
  %958 = vmatprep.subr.bf16.mxu0 0
  %959 = vmatpush1.bf16.xpose.msra.mxu0 %v940
  %960 = vmatprep.subr.bf16.mxu0 0
  %961 = vmatpush1.bf16.xpose.msra.mxu0 %v941
  %962 = vmatprep.subr.bf16.mxu0 0
  %963 = vmatpush1.bf16.xpose.msra.mxu0 %v942
  %964 = vmatprep.subr.bf16.mxu0 0
  %965 = vmatpush1.bf16.xpose.msra.mxu0 %v943
  %966 = vmatprep.subr.bf16.mxu0 0
  %967 = vmatpush1.bf16.xpose.msra.mxu0 %v944
  %968 = vmatprep.subr.bf16.mxu0 0
  %969 = vmatpush1.bf16.xpose.msra.mxu0 %v945
  %970 = vmatprep.subr.bf16.mxu0 0
  %971 = vmatpush1.bf16.xpose.msra.mxu0 %v946
  %972 = vmatprep.subr.bf16.mxu0 0
  %973 = vmatpush1.bf16.xpose.msra.mxu0 %v947
  %974 = vmatprep.subr.bf16.mxu0 0
  %975 = vmatpush1.bf16.xpose.msra.mxu0 %v948
  %976 = vmatprep.subr.bf16.mxu0 0
  %977 = vmatpush1.bf16.xpose.msra.mxu0 %v949
  %978 = vmatprep.subr.bf16.mxu0 0
  %979 = vmatpush1.bf16.xpose.msra.mxu0 %v950
  %980 = vmatprep.subr.bf16.mxu0 0
  %981 = vmatpush1.bf16.xpose.msra.mxu0 %v951
  %982 = vmatprep.subr.bf16.mxu0 0
  %983 = vmatpush1.bf16.xpose.msra.mxu0 %v952
  %984 = vmatprep.subr.bf16.mxu0 0
  %985 = vmatpush1.bf16.xpose.msra.mxu0 %v953
  %986 = vmatprep.subr.bf16.mxu0 0
  %987 = vmatpush1.bf16.xpose.msra.mxu0 %v954
  %988 = vmatprep.mubr.bf16.mxu0 0
  %989 = vmatmul.mubr.bf16.gmra.mrb[0].mxu0 %v955
  %v990 = vpop.f32.mrb[0].mxu0
  %v991 = vadd.f32 0.0, %v990
  %v992 = vpop.f32.mrb[0].mxu0
  %v993 = vadd.f32 0.0, %v992
  %v994 = vpop.f32.mrb[0].mxu0
  %v995 = vpop.f32.mrb[0].mxu0
  %996 = vdwg.mxu0
  %997 = vst [vmem:[%s4] sm:$0xff] %v991
  %998 = vst [vmem:[%s4 + $0x8] sm:$0xff] %v993
  // Predicated region
  $region18: #{_forward_batched.1} parent=0 // pred_check
    _
  $region19: #{_forward_batched.1} parent=0 // pred_check_branch
    %1000 = sbr.rel (0) target = $region21
  $region20: #{_forward_batched.1} parent=0 // pred_region
    _
  $region21: #{_forward_batched.1} parent=0 // pred_fallthru
    _
  // Predicated region
  $region22: #{_forward_batched.1} parent=0 // pred_check
    _
  $region23: #{_forward_batched.1} parent=0 // pred_check_branch
    %1002 = sbr.rel (0) target = $region25
  $region24: #{_forward_batched.1} parent=0 // pred_region
    _
  $region25: #{_forward_batched.1} parent=0 // pred_fallthru
    _

</llo_original>
